<compile_context>
chip_gen: v7x
topology: tpu7x:2x2x1
jax: 0.10.0
libtpu: 0.0.40
codegen_flags: <defaults>
</compile_context>

<pallas_src>
import functools

import jax
import jax.numpy as jnp
from jax import lax
from jax.experimental import pallas as pl
from jax.experimental.pallas import tpu as pltpu


_VMEM_LIMIT_BYTES = 32 * 1024 * 1024


def _dot_tt(x, w):
    """(tm, tk) . (tn, tk) contracted over the last dim of both -> (tm, tn)."""
    return lax.dot_general(
        x, w,
        dimension_numbers=(((1,), (1,)), ((), ())),
        preferred_element_type=jnp.float32,
    )


def _mlp_kernel_multi_k(x_ref, w_ref, b_ref, o_ref, acc_ref, *, compute_dtype):
    """One (i, j, k) grid step of y = x @ W^T + b with a K-resident accumulator.

    x_ref:   (tm, tk)  activation tile
    w_ref:   (tn, tk)  weight tile in torch (out, in) layout
    b_ref:   (1, tn)   bias tile (block index independent of k -> fetched once)
    o_ref:   (tm, tn)  output tile (written only on the last K step)
    acc_ref: (tm, tn)  float32 accumulator, resident across the K axis.
    """
    k = pl.program_id(2)

    @pl.when(k == 0)
    def _init():
        # Fold the bias add into the accumulator init.
        acc_ref[...] = jnp.broadcast_to(
            b_ref[...].astype(jnp.float32), acc_ref.shape
        )

    x = x_ref[...]
    w = w_ref[...]
    if compute_dtype is not None:
        x = x.astype(compute_dtype)
        w = w.astype(compute_dtype)

    acc_ref[...] += _dot_tt(x, w)

    @pl.when(k == pl.num_programs(2) - 1)
    def _finalize():
        o_ref[...] = acc_ref[...].astype(o_ref.dtype)


def _mlp_kernel_single_k(x_ref, w_ref, b_ref, o_ref, *, compute_dtype):
    """Whole reduction in one tile: no scratch, write the output directly."""
    x = x_ref[...]
    w = w_ref[...]
    if compute_dtype is not None:
        x = x.astype(compute_dtype)
        w = w.astype(compute_dtype)
    acc = _dot_tt(x, w) + b_ref[...].astype(jnp.float32)
    o_ref[...] = acc.astype(o_ref.dtype)


def _choose_tiles(m, n, k, itemsize):
    """Pick (tm, tn, tk) tile sizes.

    * tm: multiple of the sublane packing for the dtype (partial last M block
      is legal and masked on store).
    * tn: lane-dense multiple of 128 when possible (partial last N block OK).
    * tk: must divide K exactly — OOB reads along the reduction axis would
      corrupt the partial sums.
    """
    sub = {4: 8, 2: 16, 1: 32}.get(itemsize, 8)

    if m <= sub:
        tm = m
    else:
        tm = min(256, (m // sub) * sub)

    if n % 128 != 0:
        tn = n
    else:
        tn = min(512, n)

    if k % 128 != 0:
        tk = k
    else:
        tk = min(1024, k)
        while k % tk != 0:
            tk -= 128

    return tm, tn, tk


@functools.partial(jax.jit, static_argnames=("compute_dtype",))
def mlp_forward(x, weight, bias, *, compute_dtype=None):
    """y = x @ weight.T + bias over the last dim of x.

    x:      (..., input_dim)
    weight: (decode_dim, input_dim)   -- torch nn.Linear convention
    bias:   (decode_dim,)
    compute_dtype: optional MXU input dtype (e.g. jnp.bfloat16); accumulation
                   is always float32.
    """
    *lead, input_dim = x.shape
    decode_dim, k_dim = weight.shape
    assert k_dim == input_dim, (k_dim, input_dim)

    m = 1
    for d in lead:
        m *= int(d)

    x2 = x.reshape(m, input_dim)
    b2 = bias.reshape(1, decode_dim)

    itemsize = jnp.dtype(x.dtype).itemsize
    tm, tn, tk = _choose_tiles(m, decode_dim, input_dim, itemsize)

    grid_m = pl.cdiv(m, tm)
    grid_n = pl.cdiv(decode_dim, tn)
    grid_k = input_dim // tk

    bytes_accessed = (
        x2.size * x2.dtype.itemsize
        + weight.size * weight.dtype.itemsize
        + bias.size * bias.dtype.itemsize
        + m * decode_dim * itemsize
    )
    cost = pl.CostEstimate(
        flops=2 * m * input_dim * decode_dim,
        transcendentals=0,
        bytes_accessed=bytes_accessed,
    )

    if grid_k == 1:
        # Fast path: whole reduction in one tile, no accumulator scratch.
        kernel = functools.partial(
            _mlp_kernel_single_k, compute_dtype=compute_dtype
        )
        out = pl.pallas_call(
            kernel,
            out_shape=jax.ShapeDtypeStruct((m, decode_dim), x.dtype),
            grid_spec=pltpu.PrefetchScalarGridSpec(
                num_scalar_prefetch=0,
                grid=(grid_m, grid_n),
                in_specs=[
                    pl.BlockSpec((tm, tk), lambda i, j: (i, 0)),   # x
                    pl.BlockSpec((tn, tk), lambda i, j: (j, 0)),   # weight (out, in)
                    pl.BlockSpec((1, tn), lambda i, j: (0, j)),    # bias
                ],
                out_specs=pl.BlockSpec((tm, tn), lambda i, j: (i, j)),
            ),
            compiler_params=pltpu.CompilerParams(
                dimension_semantics=("parallel", "parallel"),
                vmem_limit_bytes=_VMEM_LIMIT_BYTES,
            ),
            cost_estimate=cost,
        )(x2, weight, b2)
    else:
        kernel = functools.partial(
            _mlp_kernel_multi_k, compute_dtype=compute_dtype
        )
        out = pl.pallas_call(
            kernel,
            out_shape=jax.ShapeDtypeStruct((m, decode_dim), x.dtype),
            grid_spec=pltpu.PrefetchScalarGridSpec(
                num_scalar_prefetch=0,
                grid=(grid_m, grid_n, grid_k),
                in_specs=[
                    pl.BlockSpec((tm, tk), lambda i, j, k: (i, k)),   # x
                    pl.BlockSpec((tn, tk), lambda i, j, k: (j, k)),   # weight (out, in)
                    pl.BlockSpec((1, tn), lambda i, j, k: (0, j)),    # bias
                ],
                out_specs=pl.BlockSpec((tm, tn), lambda i, j, k: (i, j)),
                scratch_shapes=[pltpu.VMEM((tm, tn), jnp.float32)],
            ),
            compiler_params=pltpu.CompilerParams(
                dimension_semantics=("parallel", "parallel", "arbitrary"),
                vmem_limit_bytes=_VMEM_LIMIT_BYTES,
            ),
            cost_estimate=cost,
        )(x2, weight, b2)

    return out.reshape(*lead, decode_dim)


def init_mlp_params(key, input_dim, decode_dim, dtype=jnp.float32):
    """Deterministic init matching torch.nn.Linear default (uniform +/- 1/sqrt(fan_in))."""
    kw, kb = jax.random.split(key)
    bound = 1.0 / jnp.sqrt(jnp.asarray(input_dim, jnp.float32))
    weight = jax.random.uniform(
        kw, (decode_dim, input_dim), dtype=dtype, minval=-bound, maxval=bound
    )
    bias = jax.random.uniform(
        kb, (decode_dim,), dtype=dtype, minval=-bound, maxval=bound
    )
    return weight, bias


if __name__ == "__main__":
    key = jax.random.PRNGKey(0)
    kx, kp, kx2, kp2 = jax.random.split(key, 4)

    # Small shape consistent with the torch module's lazy Linear over last dim.
    # (single-K fast path; grid = (1, 1))
    batch, seq, input_dim, decode_dim = 2, 8, 32, 16
    x = jax.random.normal(kx, (batch, seq, input_dim), dtype=jnp.float32)
    weight, bias = init_mlp_params(kp, input_dim, decode_dim)

    y = jax.block_until_ready(mlp_forward(x, weight, bias))
    y_ref = x @ weight.T + bias
    assert y.shape == (batch, seq, decode_dim)
    assert jnp.allclose(y, y_ref, atol=1e-5, rtol=1e-5)

    # Larger shape exercising the full tiled (M, N, K) path:
    #   M = 272 with tm = 256 -> partial M block,
    #   N = 640 with tn = 512 -> partial N block,
    #   K = 2048 with tk = 1024 -> 2-step K reduction (accumulator kernel).
    b_big, s_big, d_in_big, d_out_big = 2, 136, 2048, 640
    x_big = jax.random.normal(kx2, (b_big, s_big, d_in_big), dtype=jnp.float32)
    w_big, bias_big = init_mlp_params(kp2, d_in_big, d_out_big)
    y_big = jax.block_until_ready(mlp_forward(x_big, w_big, bias_big))
    y_big_ref = (
        jnp.einsum("bsi,oi->bso", x_big, w_big, precision=lax.Precision.HIGHEST)
        + bias_big
    )
    assert y_big.shape == (b_big, s_big, d_out_big)
    assert jnp.allclose(y_big, y_big_ref, atol=1e-2, rtol=1e-2)

    print("KERNEL_OK")
</pallas_src>

<mosaic_0001>
module attributes {stable_mosaic.version = 11 : i64} {
  func.func @_mlp_kernel_single_k(%arg0: i32, %arg1: i32, %arg2: memref<16x32xf32, #tpu.memory_space<vmem>>, %arg3: memref<16x32xf32, #tpu.memory_space<vmem>>, %arg4: memref<1x16xf32, #tpu.memory_space<vmem>>, %arg5: memref<16x16xf32, #tpu.memory_space<vmem>>) attributes {dimension_semantics = [#tpu.dimension_semantics<parallel>, #tpu.dimension_semantics<parallel>], iteration_bounds = array<i64: 1, 1>, scalar_prefetch = 0 : i64, scratch_operands = 0 : i64, tpu.core_type = #tpu.core_type<tc>, window_params = [{transform_indices = @transform_0, window_bounds = array<i64: 16, 32>}, {transform_indices = @transform_1, window_bounds = array<i64: 16, 32>}, {transform_indices = @transform_2, window_bounds = array<i64: 1, 16>}, {transform_indices = @transform_3, window_bounds = array<i64: 16, 16>}]} {
    %c0 = arith.constant 0 : index
    %c0_0 = arith.constant 0 : index
    %0 = vector.load %arg2[%c0, %c0_0] : memref<16x32xf32, #tpu.memory_space<vmem>>, vector<16x32xf32>
    %c0_1 = arith.constant 0 : index
    %c0_2 = arith.constant 0 : index
    %1 = vector.load %arg3[%c0_1, %c0_2] : memref<16x32xf32, #tpu.memory_space<vmem>>, vector<16x32xf32>
    %cst = arith.constant dense<0.000000e+00> : vector<16x16xf32>
    %2 = tpu.matmul %0, %1, %cst {dimension_numbers = #tpu.dot_dimension_numbers<[1], [1], [0], [0], [0, 0, 1, 0], [], []>} : vector<16x32xf32>, vector<16x32xf32>, vector<16x16xf32> -> vector<16x16xf32>
    %c0_3 = arith.constant 0 : index
    %c0_4 = arith.constant 0 : index
    %3 = vector.load %arg4[%c0_3, %c0_4] : memref<1x16xf32, #tpu.memory_space<vmem>>, vector<1x16xf32>
    %4 = vector.broadcast %3 : vector<1x16xf32> to vector<16x16xf32>
    %5 = arith.addf %2, %4 : vector<16x16xf32>
    %c0_5 = arith.constant 0 : index
    %c0_6 = arith.constant 0 : index
    %6 = vector.load %arg5[%c0_5, %c0_6] : memref<16x16xf32, #tpu.memory_space<vmem>>, vector<16x16xf32>
    tpu.vector_store %arg5[%c0_5, %c0_6], %5 {strides = array<i32>} : memref<16x16xf32, #tpu.memory_space<vmem>>, vector<16x16xf32>,
    return
  }
  func.func @transform_0(%arg0: i32, %arg1: i32) -> (i32, i32) {
    %c0_i32 = arith.constant 0 : i32
    %c0_i32_0 = arith.constant 0 : i32
    return %arg0, %c0_i32 : i32, i32
  }
  func.func @transform_1(%arg0: i32, %arg1: i32) -> (i32, i32) {
    %c0_i32 = arith.constant 0 : i32
    %c0_i32_0 = arith.constant 0 : i32
    return %arg1, %c0_i32 : i32, i32
  }
  func.func @transform_2(%arg0: i32, %arg1: i32) -> (i32, i32) {
    %c0_i32 = arith.constant 0 : i32
    %c0_i32_0 = arith.constant 0 : i32
    return %c0_i32, %arg1 : i32, i32
  }
  func.func @transform_3(%arg0: i32, %arg1: i32) -> (i32, i32) {
    %c0_i32 = arith.constant 0 : i32
    return %arg0, %arg1 : i32, i32
  }
}

</mosaic_0001>

<llo_original>
// kernel: mlp_forward.1
$region0: #{mlp_forward.1}
  #allocation0 [shape = 'u32[]', space=smem, size = 0x4, offset = 0x4, fixed_abs, tag = 'smem constant byte address 0x4 - core index']
  #allocation1 [shape = 'u32[144,128]{1,0:T(1,128)}', space=vmem, size = 0x12000, scoped, tag = 'internal scratch']
  %s0 = inlined_call_operand.hbm [shape: f32[16,32], index: 0, kind: input, shape index: {}]
  %s1 = inlined_call_operand.hbm [shape: f32[16,32], index: 1, kind: input, shape index: {}]
  %s2 = inlined_call_operand.vmem [shape: f32[1,16], index: 2, kind: input, shape index: {}]
  %s3 = inlined_call_operand.hbm [shape: f32[16,16], index: 3, kind: output, shape index: {}]
  %s4 = sld [smem:[#allocation0]]
  $region30: #{mlp_forward.1} parent=0
    _
  %s6 = ssub.s32 1, %s4
  %s7 = scalar_select 0, %s6, %s4
  $region1: #{mlp_forward.1} parent=0
    #allocation2 [shape = 'u8[8192]{0}', space=vmem, size = 0x2000, scoped, tag = 'input window, operand 0, single buffered']
    #allocation3 [shape = 's32[1]{0}', space=sflag, size = 0x4, scoped, tag = 'scoped memory for mlp_forward.1']
    #allocation4 [shape = 's32[1]{0}', space=sflag, size = 0x4, scoped, tag = 'scoped memory for mlp_forward.1']
    #allocation5 [shape = 'u8[8192]{0}', space=vmem, size = 0x2000, scoped, tag = 'input window, operand 1, single buffered']
    #allocation6 [shape = 's32[1]{0}', space=sflag, size = 0x4, scoped, tag = 'scoped memory for mlp_forward.1']
    #allocation7 [shape = 'u8[8192]{0}', space=vmem, size = 0x2000, scoped, tag = 'output window, operand 0, single buffered']
    %8 = vsyncpa [#allocation3], 0
    %9 = vsyncpa [#allocation6], 0
    %10 = vsyncpa [#allocation4], 0
    // Predicated region
    $region2: #{mlp_forward.1} parent=1 // pred_check
      _
    $region3: #{mlp_forward.1} parent=1 // pred_check_branch
      %12 = sbr.rel (0) target = $region5
    $region4: #{mlp_forward.1} parent=1 // pred_region
      %s14 = ssub.s32 256, 256
      %15 = vsyncadd [#allocation3], %s14
      %s16 = sshll.u32 [#allocation2], 4
      %s17 = int_to_ptr.vmem [resolvable:$true] %s16
      %22 = dma.hbm_to_vmem [thread:$0]  %s0, 256, %s17, [#allocation3], 128, 128, 8
    $region5: #{mlp_forward.1} parent=1 // pred_fallthru
      _
    // Predicated region
    $region6: #{mlp_forward.1} parent=1 // pred_check
      _
    $region7: #{mlp_forward.1} parent=1 // pred_check_branch
      %24 = sbr.rel (0) target = $region9
    $region8: #{mlp_forward.1} parent=1 // pred_region
      %s26 = ssub.s32 256, 256
      %27 = vsyncadd [#allocation6], %s26
      %s28 = sshll.u32 [#allocation5], 4
      %s29 = int_to_ptr.vmem [resolvable:$true] %s28
      %34 = dma.hbm_to_vmem [thread:$0]  %s1, 256, %s29, [#allocation6], 128, 128, 8
    $region9: #{mlp_forward.1} parent=1 // pred_fallthru
      _
    // Predicated region
    $region10: #{mlp_forward.1} parent=1 // pred_check
      _
    $region11: #{mlp_forward.1} parent=1 // pred_check_branch
      %36 = sbr.rel (0) target = $region13
    $region12: #{mlp_forward.1} parent=1 // pred_region
      _
    $region13: #{mlp_forward.1} parent=1 // pred_fallthru
      _
    // Predicated region
    $region14: #{mlp_forward.1} parent=1 // pred_check
      _
    $region15: #{mlp_forward.1} parent=1 // pred_check_branch
      %38 = sbr.rel (0) target = $region17
    $region16: #{mlp_forward.1} parent=1 // pred_region
      %39 = dma.done [#allocation3], 256
    $region17: #{mlp_forward.1} parent=1 // pred_fallthru
      _
    // Predicated region
    $region18: #{mlp_forward.1} parent=1 // pred_check
      _
    $region19: #{mlp_forward.1} parent=1 // pred_check_branch
      %41 = sbr.rel (0) target = $region21
    $region20: #{mlp_forward.1} parent=1 // pred_region
      %42 = dma.done [#allocation6], 256
    $region21: #{mlp_forward.1} parent=1 // pred_fallthru
      _
    %v43 = vld [vmem:[#allocation2] sm:$0xff]
    %v44 = vld [vmem:[#allocation2 + $0x8] sm:$0xff]
    %v45 = vld [vmem:[#allocation5] sm:$0xff]
    %v46 = vld [vmem:[#allocation5 + $0x8] sm:$0xff]
    %v47 = vld [vmem:[%s2] sm:$0x1]
    %v49 = vlaneseq
    %v50 = vshrl.u32 %v49, 7
    %v51 = vsub.s32 0, %v50
    %v52 = vrot.slane %v47, %v51
    %vm54 = vcmask 261120
    %v56 = vsel %vm54, %v43, 0
    %v59 = vsel %vm54, %v44, 0
    %v62 = vsel %vm54, %v45, 0
    %v65 = vsel %vm54, %v46, 0
    %67 = vmatprep.subr.mxu0 0.0
    %68 = vmatpush1.xpose.msra.mxu0 %v62
    %69 = vmatprep.subr.mxu0 0.0
    %70 = vmatpush1.xpose.msra.mxu0 %v65
    %71 = vmatprep.subr.mxu0 0.0
    %72 = vmatpush1.xpose.msra.mxu0 0.0
    %73 = vmatprep.subr.mxu0 0.0
    %74 = vmatpush1.xpose.msra.mxu0 0.0
    %75 = vmatprep.subr.mxu0 0.0
    %76 = vmatpush1.xpose.msra.mxu0 0.0
    %77 = vmatprep.subr.mxu0 0.0
    %78 = vmatpush1.xpose.msra.mxu0 0.0
    %79 = vmatprep.subr.mxu0 0.0
    %80 = vmatpush1.xpose.msra.mxu0 0.0
    %81 = vmatprep.subr.mxu0 0.0
    %82 = vmatpush1.xpose.msra.mxu0 0.0
    %83 = vmatprep.subr.mxu0 0.0
    %84 = vmatpush1.xpose.msra.mxu0 0.0
    %85 = vmatprep.subr.mxu0 0.0
    %86 = vmatpush1.xpose.msra.mxu0 0.0
    %87 = vmatprep.subr.mxu0 0.0
    %88 = vmatpush1.xpose.msra.mxu0 0.0
    %89 = vmatprep.subr.mxu0 0.0
    %90 = vmatpush1.xpose.msra.mxu0 0.0
    %91 = vmatprep.subr.mxu0 0.0
    %92 = vmatpush1.xpose.msra.mxu0 0.0
    %93 = vmatprep.subr.mxu0 0.0
    %94 = vmatpush1.xpose.msra.mxu0 0.0
    %95 = vmatprep.subr.mxu0 0.0
    %96 = vmatpush1.xpose.msra.mxu0 0.0
    %97 = vmatprep.subr.mxu0 0.0
    %98 = vmatpush1.xpose.msra.mxu0 0.0
    %99 = vmatprep.subr.mxu0 0.0
    %100 = vmatpush1.xpose.msra.mxu0 0.0
    %101 = vmatprep.subr.mxu0 0.0
    %102 = vmatpush1.xpose.msra.mxu0 0.0
    %103 = vmatprep.subr.mxu0 0.0
    %104 = vmatpush1.xpose.msra.mxu0 0.0
    %105 = vmatprep.subr.mxu0 0.0
    %106 = vmatpush1.xpose.msra.mxu0 0.0
    %107 = vmatprep.subr.mxu0 0.0
    %108 = vmatpush1.xpose.msra.mxu0 0.0
    %109 = vmatprep.subr.mxu0 0.0
    %110 = vmatpush1.xpose.msra.mxu0 0.0
    %111 = vmatprep.subr.mxu0 0.0
    %112 = vmatpush1.xpose.msra.mxu0 0.0
    %113 = vmatprep.subr.mxu0 0.0
    %114 = vmatpush1.xpose.msra.mxu0 0.0
    %115 = vmatprep.subr.mxu0 0.0
    %116 = vmatpush1.xpose.msra.mxu0 0.0
    %117 = vmatprep.subr.mxu0 0.0
    %118 = vmatpush1.xpose.msra.mxu0 0.0
    %119 = vmatprep.subr.mxu0 0.0
    %120 = vmatpush1.xpose.msra.mxu0 0.0
    %121 = vmatprep.subr.mxu0 0.0
    %122 = vmatpush1.xpose.msra.mxu0 0.0
    %123 = vmatprep.subr.mxu0 0.0
    %124 = vmatpush1.xpose.msra.mxu0 0.0
    %125 = vmatprep.subr.mxu0 0.0
    %126 = vmatpush1.xpose.msra.mxu0 0.0
    %127 = vmatprep.subr.mxu0 0.0
    %128 = vmatpush1.xpose.msra.mxu0 0.0
    %129 = vmatprep.subr.mxu0 0.0
    %130 = vmatpush1.xpose.msra.mxu0 0.0
    %131 = vmatprep.mubr.f32.mxu0 0.0
    %132 = vmatmul.mubr.f32.gmra.mrb[0].mxu0 %v56
    %v133 = vpop.f32.mrb[0].mxu0
    %v134 = vadd.f32 %v52, %v133
    %v135 = vpop.f32.mrb[0].mxu0
    %136 = vmatprep.mubr.f32.mxu0 0.0
    %137 = vmatmul.mubr.f32.gmra.mrb[0].mxu0 %v59
    %v138 = vpop.f32.mrb[0].mxu0
    %v139 = vadd.f32 %v52, %v138
    %v140 = vpop.f32.mrb[0].mxu0
    %141 = vdwg.mxu0
    %vm142 = vcmask 130048
    %143 = vst.msk [vmem:[#allocation7] sm:$0xff] %vm142, %v134
    %144 = vst.msk [vmem:[#allocation7 + $0x8] sm:$0xff] %vm142, %v139
    // Predicated region
    $region22: #{mlp_forward.1} parent=1 // pred_check
      _
    $region23: #{mlp_forward.1} parent=1 // pred_check_branch
      %146 = sbr.rel (0) target = $region25
    $region24: #{mlp_forward.1} parent=1 // pred_region
      %s148 = ssub.s32 256, 256
      %149 = vsyncadd [#allocation4], %s148
      %s150 = sshll.u32 [#allocation7], 4
      %s151 = int_to_ptr.vmem [resolvable:$true] %s150
      %156 = dma.vmem_to_hbm [thread:$0]  %s151, 256, %s3, [#allocation4], 128, 128, 8
    $region25: #{mlp_forward.1} parent=1 // pred_fallthru
      _
    // Predicated region
    $region26: #{mlp_forward.1} parent=1 // pred_check
      _
    $region27: #{mlp_forward.1} parent=1 // pred_check_branch
      %158 = sbr.rel (0) target = $region29
    $region28: #{mlp_forward.1} parent=1 // pred_region
      %159 = dma.done [#allocation4], 256
    $region29: #{mlp_forward.1} parent=1 // pred_fallthru
      _
    %160 = vsyncpa [#allocation3], 1
    %161 = vsyncpa [#allocation6], 1
    %162 = vsyncpa [#allocation4], 1

</llo_original>
